<compile_context>
chip_gen: v6e
topology: v6e:2x2x1
jax: 0.10.0
libtpu: 0.0.40
codegen_flags: <defaults>
</compile_context>

<pallas_src>
import math

import jax
import jax.numpy as jnp
from jax.experimental import pallas as pl
from jax.experimental.pallas import tpu as pltpu


def _fused_linear2x_relu_kernel(x_ref, wt_ref, b_ref, o_ref):
    # x_ref: (TB, IN)   wt_ref: (IN, OUT)   b_ref: (1, OUT)   o_ref: (TB, OUT)
    x = x_ref[...].astype(jnp.float32)
    wt = wt_ref[...].astype(jnp.float32)
    y = jnp.broadcast_to(b_ref[...].astype(jnp.float32), o_ref.shape)
    for c in range(wt.shape[0]):          # IN is tiny (3): statically unrolled FMAs
        y = y + x[:, c:c + 1] * wt[c:c + 1, :]
    o_ref[...] = jnp.maximum(y, 0.0).astype(o_ref.dtype)


def _round_up(n, m):
    return ((n + m - 1) // m) * m


def _pick_batch_tile(batch, tb, min_steps):
    """Batch-tile size: big, sublane/lane friendly, and capped so large batches keep
    a multi-step grid (DMA pipelining + v7x two-core sharding).  No gcd games."""
    tb = min(max(tb, 128), 8192)
    if batch <= 8:
        return batch                       # block equal to the full (tiny) extent
    batch8 = _round_up(batch, 8)
    if batch8 <= tb:
        return batch8                      # single sublane-aligned tile
    # >= min_steps grid steps, tiles are multiples of 128, at most `tb`
    return min(tb, max(128, _round_up(-(-batch // min_steps), 128)))


def fused_linear2x_relu(x, w2t, b2row, *, tb=2048, min_steps=4):
    """relu(x @ w2t + b2row) with w2t = (2W)^T : (IN, OUT), b2row = 2b : (1, OUT)."""
    B, IN = x.shape
    OUT = w2t.shape[1]
    TB = _pick_batch_tile(B, tb, min_steps)
    grid = (pl.cdiv(B, TB),)

    return pl.pallas_call(
        _fused_linear2x_relu_kernel,
        out_shape=jax.ShapeDtypeStruct((B, OUT), x.dtype),
        grid=grid,
        in_specs=[
            pl.BlockSpec((TB, IN), lambda i: (i, 0)),     # x tile, marches over batch
            pl.BlockSpec((IN, OUT), lambda i: (0, 0)),    # (2W)^T, grid-invariant
            pl.BlockSpec((1, OUT), lambda i: (0, 0)),     # 2b row, grid-invariant
        ],
        out_specs=pl.BlockSpec((TB, OUT), lambda i: (i, 0)),
        compiler_params=pltpu.CompilerParams(
            dimension_semantics=("parallel",),
        ),
    )(x, w2t, b2row)


def model_forward(x, w2t, b2row, *, prefer_pallas=None, tb=2048):
    """Full module forward.  For tiny batches the pallas_call (custom-call) overhead
    dominates the ~KiB of real work, so dispatch to a single XLA fusion there."""
    B = x.shape[0]
    if prefer_pallas is None:
        prefer_pallas = B >= 1024
    if not prefer_pallas:
        return jnp.maximum(x @ w2t + b2row, 0.0)
    return fused_linear2x_relu(x, w2t, b2row, tb=tb)


def make_params(key, in_features=3, out_features=8):
    """nn.Linear-style init.  Returns (W, b) for the reference plus the *2-folded,
    pre-transposed params (w2t, b2row) the kernel consumes (done once, off the hot path)."""
    k_w, k_b = jax.random.split(key)
    bound = 1.0 / math.sqrt(in_features)
    w = jax.random.uniform(k_w, (out_features, in_features), jnp.float32, -bound, bound)
    b = jax.random.uniform(k_b, (out_features,), jnp.float32, -bound, bound)
    return w, b, (2.0 * w).T, (2.0 * b).reshape(1, out_features)


if __name__ == "__main__":
    key = jax.random.PRNGKey(0)
    k_x, k_p, k_big = jax.random.split(key, 3)

    IN, OUT = 3, 8
    w, b, w2t, b2row = make_params(k_p, IN, OUT)

    # --- spec-parity case: x2 = torch.randn(1, 3), forced through the Pallas kernel ---
    x = jax.random.normal(k_x, (1, IN), jnp.float32)
    out = jax.block_until_ready(fused_linear2x_relu(x, w2t, b2row))
    ref = jnp.maximum((x @ w.T + b) * 2.0, 0.0)
    assert out.shape == (1, OUT)
    assert jnp.allclose(out, ref, atol=1e-5, rtol=1e-5), (out, ref)

    # --- small batched case: multi-step grid + ragged last tile (300 % 128 != 0) ---
    xb = jax.random.normal(k_big, (300, IN), jnp.float32)
    outb = jax.block_until_ready(fused_linear2x_relu(xb, w2t, b2row, tb=128))
    refb = jnp.maximum((xb @ w.T + b) * 2.0, 0.0)
    assert outb.shape == (300, OUT)
    assert jnp.allclose(outb, refb, atol=1e-5, rtol=1e-5)

    # --- tiny-batch dispatch path (plain XLA fusion) sanity check ---
    outd = jax.block_until_ready(model_forward(x, w2t, b2row))
    assert jnp.allclose(outd, ref, atol=1e-5, rtol=1e-5)

    print("KERNEL_OK")
</pallas_src>

<mosaic_0001>
module attributes {stable_mosaic.version = 11 : i64} {
  func.func @_fused_linear2x_relu_kernel(%arg0: i32, %arg1: memref<1x3xf32, #tpu.memory_space<vmem>>, %arg2: memref<3x8xf32, #tpu.memory_space<vmem>>, %arg3: memref<1x8xf32, #tpu.memory_space<vmem>>, %arg4: memref<1x8xf32, #tpu.memory_space<vmem>>) attributes {dimension_semantics = [#tpu.dimension_semantics<parallel>], iteration_bounds = array<i64: 1>, scalar_prefetch = 0 : i64, scratch_operands = 0 : i64, tpu.core_type = #tpu.core_type<tc>, window_params = [{transform_indices = @transform_0, window_bounds = array<i64: 1, 3>}, {pipeline_mode = #tpu.pipeline_mode<synchronous>, transform_indices = @transform_1, window_bounds = array<i64: 3, 8>}, {pipeline_mode = #tpu.pipeline_mode<synchronous>, transform_indices = @transform_2, window_bounds = array<i64: 1, 8>}, {transform_indices = @transform_3, window_bounds = array<i64: 1, 8>}]} {
    %c0 = arith.constant 0 : index
    %c0_0 = arith.constant 0 : index
    %0 = vector.load %arg1[%c0, %c0_0] : memref<1x3xf32, #tpu.memory_space<vmem>>, vector<1x3xf32>
    %c0_1 = arith.constant 0 : index
    %c0_2 = arith.constant 0 : index
    %1 = vector.load %arg2[%c0_1, %c0_2] : memref<3x8xf32, #tpu.memory_space<vmem>>, vector<3x8xf32>
    %c0_3 = arith.constant 0 : index
    %c0_4 = arith.constant 0 : index
    %2 = vector.load %arg3[%c0_3, %c0_4] : memref<1x8xf32, #tpu.memory_space<vmem>>, vector<1x8xf32>
    %3 = vector.extract_strided_slice %0 {offsets = [0, 0], sizes = [1, 1], strides = [1, 1]} : vector<1x3xf32> to vector<1x1xf32>
    %4 = vector.extract_strided_slice %1 {offsets = [0, 0], sizes = [1, 8], strides = [1, 1]} : vector<3x8xf32> to vector<1x8xf32>
    %5 = vector.broadcast %3 : vector<1x1xf32> to vector<1x8xf32>
    %6 = arith.mulf %5, %4 : vector<1x8xf32>
    %7 = arith.addf %2, %6 : vector<1x8xf32>
    %8 = vector.extract_strided_slice %0 {offsets = [0, 1], sizes = [1, 1], strides = [1, 1]} : vector<1x3xf32> to vector<1x1xf32>
    %9 = vector.extract_strided_slice %1 {offsets = [1, 0], sizes = [1, 8], strides = [1, 1]} : vector<3x8xf32> to vector<1x8xf32>
    %10 = vector.broadcast %8 : vector<1x1xf32> to vector<1x8xf32>
    %11 = arith.mulf %10, %9 : vector<1x8xf32>
    %12 = arith.addf %7, %11 : vector<1x8xf32>
    %13 = vector.extract_strided_slice %0 {offsets = [0, 2], sizes = [1, 1], strides = [1, 1]} : vector<1x3xf32> to vector<1x1xf32>
    %14 = vector.extract_strided_slice %1 {offsets = [2, 0], sizes = [1, 8], strides = [1, 1]} : vector<3x8xf32> to vector<1x8xf32>
    %15 = vector.broadcast %13 : vector<1x1xf32> to vector<1x8xf32>
    %16 = arith.mulf %15, %14 : vector<1x8xf32>
    %17 = arith.addf %12, %16 : vector<1x8xf32>
    %cst = arith.constant 0.000000e+00 : f32
    %18 = vector.broadcast %cst : f32 to vector<1x8xf32>
    %19 = arith.maximumf %17, %18 : vector<1x8xf32>
    %c0_5 = arith.constant 0 : index
    %c0_6 = arith.constant 0 : index
    %20 = vector.load %arg4[%c0_5, %c0_6] : memref<1x8xf32, #tpu.memory_space<vmem>>, vector<1x8xf32>
    tpu.vector_store %arg4[%c0_5, %c0_6], %19 {strides = array<i32>} : memref<1x8xf32, #tpu.memory_space<vmem>>, vector<1x8xf32>,
    return
  }
  func.func @transform_0(%arg0: i32) -> (i32, i32) {
    %c0_i32 = arith.constant 0 : i32
    %c0_i32_0 = arith.constant 0 : i32
    return %arg0, %c0_i32 : i32, i32
  }
  func.func @transform_1(%arg0: i32) -> (i32, i32) {
    %c0_i32 = arith.constant 0 : i32
    %c0_i32_0 = arith.constant 0 : i32
    %c0_i32_1 = arith.constant 0 : i32
    return %c0_i32, %c0_i32_0 : i32, i32
  }
  func.func @transform_2(%arg0: i32) -> (i32, i32) {
    %c0_i32 = arith.constant 0 : i32
    %c0_i32_0 = arith.constant 0 : i32
    %c0_i32_1 = arith.constant 0 : i32
    return %c0_i32, %c0_i32_0 : i32, i32
  }
  func.func @transform_3(%arg0: i32) -> (i32, i32) {
    %c0_i32 = arith.constant 0 : i32
    %c0_i32_0 = arith.constant 0 : i32
    return %arg0, %c0_i32 : i32, i32
  }
}

</mosaic_0001>

<llo_original>
// kernel: tpu_custom_call.1
$region0: #{tpu_custom_call.1}
  #allocation0 [shape = 'u32[]', space=smem, size = 0x4, offset = 0x4, fixed_abs, tag = 'smem constant byte address 0x4 - core index']
  #allocation1 [shape = 'u32[144,128]{1,0:T(1,128)}', space=vmem, size = 0x12000, scoped, tag = 'internal scratch']
  %s0 = inlined_call_operand.hbm [shape: f32[1,3], index: 0, kind: input, shape index: {}]
  %s1 = inlined_call_operand.hbm [shape: f32[3,8], index: 1, kind: input, shape index: {}]
  %s2 = inlined_call_operand.vmem [shape: f32[1,8], index: 2, kind: input, shape index: {}]
  %s3 = inlined_call_operand.hbm [shape: f32[1,8], index: 3, kind: output, shape index: {}]
  %s4 = sld [smem:[#allocation0]]
  $region30: #{tpu_custom_call.1} parent=0
    _
  %s6 = ssub.s32 1, %s4
  %s7 = scalar_select 0, %s6, %s4
  $region1: #{tpu_custom_call.1} parent=0
    #allocation2 [shape = 'u8[512]{0}', space=vmem, size = 0x400, scoped, tag = 'input window, operand 0, single buffered']
    #allocation3 [shape = 's32[1]{0}', space=sflag, size = 0x4, scoped, tag = 'scoped memory for tpu_custom_call.1']
    #allocation4 [shape = 's32[1]{0}', space=sflag, size = 0x4, scoped, tag = 'scoped memory for tpu_custom_call.1']
    #allocation5 [shape = 'u8[2048]{0}', space=vmem, size = 0x800, scoped, tag = 'input window, operand 1, single buffered']
    #allocation6 [shape = 's32[1]{0}', space=sflag, size = 0x4, scoped, tag = 'scoped memory for tpu_custom_call.1']
    #allocation7 [shape = 'u8[512]{0}', space=vmem, size = 0x400, scoped, tag = 'output window, operand 0, single buffered']
    %8 = vsyncpa [#allocation3], 0
    %9 = vsyncpa [#allocation6], 0
    %10 = vsyncpa [#allocation4], 0
    // Predicated region
    $region2: #{tpu_custom_call.1} parent=1 // pred_check
      _
    $region3: #{tpu_custom_call.1} parent=1 // pred_check_branch
      %12 = sbr.rel (0) target = $region5
    $region4: #{tpu_custom_call.1} parent=1 // pred_region
      %s14 = ssub.s32 16, 16
      %15 = vsyncadd [#allocation3], %s14
      %s17 = sshll.u32 [#allocation2], 4
      %s18 = int_to_ptr.vmem [resolvable:$true] %s17
      %20 = dma.hbm_to_vmem [thread:$0]  %s0, 16, %s18, [#allocation3]
    $region5: #{tpu_custom_call.1} parent=1 // pred_fallthru
      _
    // Predicated region
    $region6: #{tpu_custom_call.1} parent=1 // pred_check
      _
    $region7: #{tpu_custom_call.1} parent=1 // pred_check_branch
      %22 = sbr.rel (0) target = $region9
    $region8: #{tpu_custom_call.1} parent=1 // pred_region
      %s24 = ssub.s32 64, 64
      %25 = vsyncadd [#allocation6], %s24
      %s27 = sshll.u32 [#allocation5], 4
      %s28 = int_to_ptr.vmem [resolvable:$true] %s27
      %30 = dma.hbm_to_vmem [thread:$0]  %s1, 64, %s28, [#allocation6]
    $region9: #{tpu_custom_call.1} parent=1 // pred_fallthru
      _
    // Predicated region
    $region10: #{tpu_custom_call.1} parent=1 // pred_check
      _
    $region11: #{tpu_custom_call.1} parent=1 // pred_check_branch
      %32 = sbr.rel (0) target = $region13
    $region12: #{tpu_custom_call.1} parent=1 // pred_region
      _
    $region13: #{tpu_custom_call.1} parent=1 // pred_fallthru
      _
    // Predicated region
    $region14: #{tpu_custom_call.1} parent=1 // pred_check
      _
    $region15: #{tpu_custom_call.1} parent=1 // pred_check_branch
      %34 = sbr.rel (0) target = $region17
    $region16: #{tpu_custom_call.1} parent=1 // pred_region
      %35 = dma.done [#allocation3], 16
    $region17: #{tpu_custom_call.1} parent=1 // pred_fallthru
      _
    // Predicated region
    $region18: #{tpu_custom_call.1} parent=1 // pred_check
      _
    $region19: #{tpu_custom_call.1} parent=1 // pred_check_branch
      %37 = sbr.rel (0) target = $region21
    $region20: #{tpu_custom_call.1} parent=1 // pred_region
      %38 = dma.done [#allocation6], 64
    $region21: #{tpu_custom_call.1} parent=1 // pred_fallthru
      _
    %v39 = vld [vmem:[#allocation2] sm:$0x1]
    %v40 = vld [vmem:[#allocation5] sm:$0x7]
    %v41 = vld [vmem:[%s2] sm:$0x1]
    %43 = vset.pattern.permute.xlu0 0
    %44 = vperm.xlu0 %43, %v39
    %v45 = vpop.permute.xlu0 %44
    %v47 = vlaneseq
    %v48 = vshrl.u32 %v47, 7
    %v49 = vsub.s32 0, %v48
    %v50 = vrot.slane %v45, %v49
    %v51 = vmul.f32 %v50, %v40
    %v52 = vadd.f32 %v41, %v51
    %53 = vset.pattern.permute.xlu0 1
    %54 = vperm.xlu0 %53, %v39
    %v55 = vpop.permute.xlu0 %54
    %v57 = vlaneseq
    %v58 = vshrl.u32 %v57, 7
    %v59 = vsub.s32 0, %v58
    %v60 = vrot.slane %v55, %v59
    %v61 = vmul.f32 %v60, %v40
    %v64 = vunpack.c.l.s4 1966171168
    %v65 = vunpack.c.0.s8 %v64
    %v66 = vlaneseq
    %v67 = vshrl.u32 %v66, 7
    %v68 = vsub.s32 %v65, %v67
    %v69 = vrot.slane %v61, %v68
    %v70 = vcombine.high %v69, %v69
    %v72 = vunpack.c.l.s4 1966171168
    %v73 = vunpack.c.0.s8 %v72
    %v74 = vlaneseq
    %v75 = vshrl.u32 %v74, 7
    %v76 = vsub.s32 %v73, %v75
    %v77 = vrot.slane %v70, %v76
    %v79 = vadd.f32 %v52, %v77
    %80 = vset.pattern.permute.xlu0 2
    %81 = vperm.xlu0 %80, %v39
    %v82 = vpop.permute.xlu0 %81
    %v84 = vlaneseq
    %v85 = vshrl.u32 %v84, 7
    %v86 = vsub.s32 0, %v85
    %v87 = vrot.slane %v82, %v86
    %v88 = vmul.f32 %v87, %v40
    %v91 = vunpack.c.l.s4 1966171168
    %v92 = vunpack.c.0.s8 %v91
    %v93 = vlaneseq
    %v94 = vshrl.u32 %v93, 7
    %v95 = vsub.s32 %v92, %v94
    %v96 = vrot.slane %v88, %v95
    %v98 = vunpack.c.l.s4 1966171168
    %v99 = vunpack.c.0.s8 %v98
    %v100 = vlaneseq
    %v101 = vshrl.u32 %v100, 7
    %v102 = vsub.s32 %v99, %v101
    %v103 = vrot.slane %v96, %v102
    %v104 = vcombine.high %v103, %v103
    %v106 = vadd.f32 %v79, %v104
    %v107 = vmax.f32 %v106, 0.0
    %vm108 = vcmask 57344
    %109 = vst.msk [vmem:[#allocation7] sm:$0x1] %vm108, %v107
    // Predicated region
    $region22: #{tpu_custom_call.1} parent=1 // pred_check
      _
    $region23: #{tpu_custom_call.1} parent=1 // pred_check_branch
      %111 = sbr.rel (0) target = $region25
    $region24: #{tpu_custom_call.1} parent=1 // pred_region
      %s113 = ssub.s32 16, 16
      %114 = vsyncadd [#allocation4], %s113
      %s116 = sshll.u32 [#allocation7], 4
      %s117 = int_to_ptr.vmem [resolvable:$true] %s116
      %119 = dma.vmem_to_hbm [thread:$0]  %s117, 16, %s3, [#allocation4]
    $region25: #{tpu_custom_call.1} parent=1 // pred_fallthru
      _
    // Predicated region
    $region26: #{tpu_custom_call.1} parent=1 // pred_check
      _
    $region27: #{tpu_custom_call.1} parent=1 // pred_check_branch
      %121 = sbr.rel (0) target = $region29
    $region28: #{tpu_custom_call.1} parent=1 // pred_region
      %122 = dma.done [#allocation4], 16
    $region29: #{tpu_custom_call.1} parent=1 // pred_fallthru
      _
    %123 = vsyncpa [#allocation3], 1
    %124 = vsyncpa [#allocation6], 1
    %125 = vsyncpa [#allocation4], 1

</llo_original>
